<compile_context>
chip_gen: v5e
topology: v5e:2x2
jax: 0.10.0
libtpu: 0.0.40
codegen_flags: <defaults>
</compile_context>

<pallas_src>
import functools

import jax
import jax.numpy as jnp
from jax.experimental import pallas as pl
from jax.experimental.pallas import tpu as pltpu


_VMEM_LIMIT_BYTES = 32 * 1024 * 1024    # > v5e 16 MiB default, <= v6e/v7x scoped default
_TILE_VMEM_BUDGET = 20 * 1024 * 1024    # target working set (leaves headroom on v7x)
_MAX_ROW_TILE = 1024                    # amortizes ~0.35 us/grid-step overhead


def _norm_kernel(x_ref, alpha_ref, bias_ref, o_ref, *, eps):
    x = x_ref[...].astype(jnp.float32)            # (TM, D)
    alpha = alpha_ref[...].astype(jnp.float32)    # (1, D)
    bias = bias_ref[...].astype(jnp.float32)      # (1, D)

    mean = jnp.mean(x, axis=-1, keepdims=True)                    # (TM, 1)
    centered = x - mean
    var = jnp.mean(centered * centered, axis=-1, keepdims=True)   # unbiased=False
    std = jnp.sqrt(var)
    inv = pl.reciprocal(std + eps, approx=False)                  # exact 1/(std+eps)
    o_ref[...] = (centered * (alpha * inv) + bias).astype(o_ref.dtype)


def _pick_row_tile(R, D, dtype):
    """Largest row tile (8/16-aligned) whose pipelined working set fits budget."""
    dtype_bytes = jnp.dtype(dtype).itemsize
    align = 16 if dtype_bytes < 4 else 8
    # Double-buffered input + output blocks in native dtype, plus ~3 f32-wide
    # per-row temporaries live inside the kernel body (x upcast, centered, out).
    bytes_per_row = D * (4 * dtype_bytes + 3 * 4)
    max_rows = max(align, _TILE_VMEM_BUDGET // max(bytes_per_row, 1))
    row_tile = min(_MAX_ROW_TILE, max_rows)
    row_tile = max(align, (row_tile // align) * align)
    if row_tile >= R:
        return R  # single full block (allowed even if R is not 8/16-aligned)
    return row_tile


def norm_forward(x, alpha, bias, eps=1e-6, row_tile=None):
    """x: [..., D]; alpha, bias: [D]."""
    orig_shape = x.shape
    D = orig_shape[-1]
    R = 1
    for s in orig_shape[:-1]:
        R *= s

    x2 = x.reshape(R, D)
    alpha2 = alpha.reshape(1, D)
    bias2 = bias.reshape(1, D)

    if row_tile is None:
        row_tile = _pick_row_tile(R, D, x.dtype)
    row_tile = min(row_tile, R)

    grid = (pl.cdiv(R, row_tile),)   # ragged last block is padded by Pallas

    dtype_bytes = jnp.dtype(x.dtype).itemsize
    cost = pl.CostEstimate(
        flops=7 * R * D,
        transcendentals=2 * R,                               # sqrt + reciprocal per row
        bytes_accessed=2 * R * D * dtype_bytes + 2 * D * 4,  # read x + write out (+ params)
    )

    # TODO(synk): if production emb_dim D < 128, the output store is
    # lane-sparse (masked vst); pack multiple rows per 128-lane row or pad D
    # to 128 outside the kernel for a lane-dense store path.
    out = pl.pallas_call(
        functools.partial(_norm_kernel, eps=eps),
        out_shape=jax.ShapeDtypeStruct((R, D), x.dtype),
        grid_spec=pltpu.PrefetchScalarGridSpec(
            num_scalar_prefetch=0,
            grid=grid,
            in_specs=[
                pl.BlockSpec((row_tile, D), lambda i: (i, 0)),
                pl.BlockSpec((1, D), lambda i: (0, 0)),
                pl.BlockSpec((1, D), lambda i: (0, 0)),
            ],
            out_specs=pl.BlockSpec((row_tile, D), lambda i: (i, 0)),
        ),
        compiler_params=pltpu.CompilerParams(
            dimension_semantics=("parallel",),
            vmem_limit_bytes=_VMEM_LIMIT_BYTES,
        ),
        cost_estimate=cost,
    )(x2, alpha2, bias2)

    return out.reshape(orig_shape)


def _reference(x, alpha, bias, eps=1e-6):
    xf = x.astype(jnp.float32)
    mean = jnp.mean(xf, axis=-1, keepdims=True)
    var = jnp.mean((xf - mean) ** 2, axis=-1, keepdims=True)
    std = jnp.sqrt(var)
    return (alpha * (xf - mean) / (std + eps) + bias).astype(x.dtype)


if __name__ == "__main__":
    key = jax.random.PRNGKey(0)

    # Deterministic parameter init matching nn.Parameter(torch.ones/zeros(D)).
    D = 32
    alpha = jnp.ones((D,), dtype=jnp.float32)
    bias = jnp.zeros((D,), dtype=jnp.float32)

    # Test 1: small [B, S, D] matching the module's use (batch, seq, emb_dim).
    B, S = 2, 8
    x = jax.random.normal(key, (B, S, D), dtype=jnp.float32)
    out = jax.block_until_ready(norm_forward(x, alpha, bias, eps=1e-6))
    ref = _reference(x, alpha, bias, eps=1e-6)
    assert out.shape == x.shape
    assert jnp.allclose(out, ref, atol=1e-5, rtol=1e-5), "mismatch vs reference"

    # Test 2: exercise the multi-step / ragged-last-block grid path
    # (R = 21 rows, row_tile = 8 -> grid of 3 with a padded last block).
    key2 = jax.random.PRNGKey(1)
    x2 = jax.random.normal(key2, (3, 7, D), dtype=jnp.float32)
    out2 = jax.block_until_ready(norm_forward(x2, alpha, bias, eps=1e-6, row_tile=8))
    ref2 = _reference(x2, alpha, bias, eps=1e-6)
    assert out2.shape == x2.shape
    assert jnp.allclose(out2, ref2, atol=1e-5, rtol=1e-5), "mismatch vs reference (tiled)"

    # TODO(synk): `norm.retain_grad()` is PyTorch autograd bookkeeping with no
    # forward-pass effect; nothing to translate.
    print("KERNEL_OK")
</pallas_src>

<mosaic_0001>
module attributes {stable_mosaic.version = 11 : i64} {
  func.func @_norm_kernel(%arg0: i32, %arg1: memref<16x32xf32, #tpu.memory_space<vmem>>, %arg2: memref<1x32xf32, #tpu.memory_space<vmem>>, %arg3: memref<1x32xf32, #tpu.memory_space<vmem>>, %arg4: memref<16x32xf32, #tpu.memory_space<vmem>>) attributes {dimension_semantics = [#tpu.dimension_semantics<parallel>], iteration_bounds = array<i64: 1>, scalar_prefetch = 0 : i64, scratch_operands = 0 : i64, tpu.core_type = #tpu.core_type<tc>, window_params = [{transform_indices = @transform_0, window_bounds = array<i64: 16, 32>}, {pipeline_mode = #tpu.pipeline_mode<synchronous>, transform_indices = @transform_1, window_bounds = array<i64: 1, 32>}, {pipeline_mode = #tpu.pipeline_mode<synchronous>, transform_indices = @transform_2, window_bounds = array<i64: 1, 32>}, {transform_indices = @transform_3, window_bounds = array<i64: 16, 32>}]} {
    %c0 = arith.constant 0 : index
    %c0_0 = arith.constant 0 : index
    %0 = vector.load %arg1[%c0, %c0_0] : memref<16x32xf32, #tpu.memory_space<vmem>>, vector<16x32xf32>
    %c0_1 = arith.constant 0 : index
    %c0_2 = arith.constant 0 : index
    %1 = vector.load %arg2[%c0_1, %c0_2] : memref<1x32xf32, #tpu.memory_space<vmem>>, vector<1x32xf32>
    %c0_3 = arith.constant 0 : index
    %c0_4 = arith.constant 0 : index
    %2 = vector.load %arg3[%c0_3, %c0_4] : memref<1x32xf32, #tpu.memory_space<vmem>>, vector<1x32xf32>
    %cst = arith.constant dense<0.000000e+00> : vector<16xf32>
    %3 = vector.multi_reduction <add>, %0, %cst [1] : vector<16x32xf32> to vector<16xf32>
    %4 = vector.shape_cast %3 : vector<16xf32> to vector<16x1xf32>
    %cst_5 = arith.constant 3.200000e+01 : f32
    %5 = vector.broadcast %cst_5 : f32 to vector<16x1xf32>
    %6 = arith.divf %4, %5 : vector<16x1xf32>
    %7 = vector.broadcast %6 : vector<16x1xf32> to vector<16x32xf32>
    %8 = arith.subf %0, %7 : vector<16x32xf32>
    %9 = arith.mulf %8, %8 : vector<16x32xf32>
    %cst_6 = arith.constant dense<0.000000e+00> : vector<16xf32>
    %10 = vector.multi_reduction <add>, %9, %cst_6 [1] : vector<16x32xf32> to vector<16xf32>
    %11 = vector.shape_cast %10 : vector<16xf32> to vector<16x1xf32>
    %cst_7 = arith.constant 3.200000e+01 : f32
    %12 = vector.broadcast %cst_7 : f32 to vector<16x1xf32>
    %13 = arith.divf %11, %12 : vector<16x1xf32>
    %14 = math.sqrt %13 : vector<16x1xf32>
    %cst_8 = arith.constant 9.99999997E-7 : f32
    %15 = vector.broadcast %cst_8 : f32 to vector<16x1xf32>
    %16 = arith.addf %14, %15 : vector<16x1xf32>
    %17 = tpu.reciprocal %16 : vector<16x1xf32> -> vector<16x1xf32>
    %18 = vector.broadcast %1 : vector<1x32xf32> to vector<16x32xf32>
    %19 = vector.broadcast %17 : vector<16x1xf32> to vector<16x32xf32>
    %20 = arith.mulf %18, %19 : vector<16x32xf32>
    %21 = arith.mulf %8, %20 : vector<16x32xf32>
    %22 = vector.broadcast %2 : vector<1x32xf32> to vector<16x32xf32>
    %23 = arith.addf %21, %22 : vector<16x32xf32>
    %c0_9 = arith.constant 0 : index
    %c0_10 = arith.constant 0 : index
    %24 = vector.load %arg4[%c0_9, %c0_10] : memref<16x32xf32, #tpu.memory_space<vmem>>, vector<16x32xf32>
    tpu.vector_store %arg4[%c0_9, %c0_10], %23 {strides = array<i32>} : memref<16x32xf32, #tpu.memory_space<vmem>>, vector<16x32xf32>,
    return
  }
  func.func @transform_0(%arg0: i32) -> (i32, i32) {
    %c0_i32 = arith.constant 0 : i32
    %c0_i32_0 = arith.constant 0 : i32
    return %arg0, %c0_i32 : i32, i32
  }
  func.func @transform_1(%arg0: i32) -> (i32, i32) {
    %c0_i32 = arith.constant 0 : i32
    %c0_i32_0 = arith.constant 0 : i32
    %c0_i32_1 = arith.constant 0 : i32
    return %c0_i32, %c0_i32_0 : i32, i32
  }
  func.func @transform_2(%arg0: i32) -> (i32, i32) {
    %c0_i32 = arith.constant 0 : i32
    %c0_i32_0 = arith.constant 0 : i32
    %c0_i32_1 = arith.constant 0 : i32
    return %c0_i32, %c0_i32_0 : i32, i32
  }
  func.func @transform_3(%arg0: i32) -> (i32, i32) {
    %c0_i32 = arith.constant 0 : i32
    %c0_i32_0 = arith.constant 0 : i32
    return %arg0, %c0_i32 : i32, i32
  }
}

</mosaic_0001>

<llo_original>
// kernel: tpu_custom_call.1
$region0: #{tpu_custom_call.1}
  #allocation0 [shape = 'u32[]', space=smem, size = 0x4, offset = 0x4, fixed_abs, tag = 'smem constant byte address 0x4 - core index']
  #allocation1 [shape = 'u32[72,128]{1,0:T(1,128)}', space=vmem, size = 0x9000, scoped, tag = 'internal scratch']
  %s0 = inlined_call_operand.hbm [shape: f32[16,32], index: 0, kind: input, shape index: {}]
  %s1 = inlined_call_operand.hbm [shape: f32[1,32], index: 1, kind: input, shape index: {}]
  %s2 = inlined_call_operand.vmem [shape: f32[1,32], index: 2, kind: input, shape index: {}]
  %s3 = inlined_call_operand.hbm [shape: f32[16,32], index: 3, kind: output, shape index: {}]
  %s4 = sld [smem:[#allocation0]]
  $region30: #{tpu_custom_call.1} parent=0
    _
  %s6 = ssub.s32 1, %s4
  %s7 = scalar_select 0, %s6, %s4
  $region1: #{tpu_custom_call.1} parent=0
    #allocation2 [shape = 'u8[8192]{0}', space=vmem, size = 0x2000, scoped, tag = 'input window, operand 0, single buffered']
    #allocation3 [shape = 's32[1]{0}', space=sflag, size = 0x4, scoped, tag = 'scoped memory for tpu_custom_call.1']
    #allocation4 [shape = 's32[1]{0}', space=sflag, size = 0x4, scoped, tag = 'scoped memory for tpu_custom_call.1']
    #allocation5 [shape = 'u8[512]{0}', space=vmem, size = 0x400, scoped, tag = 'input window, operand 1, single buffered']
    #allocation6 [shape = 's32[1]{0}', space=sflag, size = 0x4, scoped, tag = 'scoped memory for tpu_custom_call.1']
    #allocation7 [shape = 'u8[8192]{0}', space=vmem, size = 0x2000, scoped, tag = 'output window, operand 0, single buffered']
    %8 = vsyncpa [#allocation3], 0
    %9 = vsyncpa [#allocation6], 0
    %10 = vsyncpa [#allocation4], 0
    // Predicated region
    $region2: #{tpu_custom_call.1} parent=1 // pred_check
      _
    $region3: #{tpu_custom_call.1} parent=1 // pred_check_branch
      %12 = sbr.rel (0) target = $region5
    $region4: #{tpu_custom_call.1} parent=1 // pred_region
      %14 = vsyncadd [#allocation3], 0
      %s15 = sshll.u32 %s0, 4
      %s16 = int_to_ptr.hbm [resolvable:$true] %s15
      %s17 = sshll.u32 [#allocation2], 4
      %s18 = int_to_ptr.vmem [resolvable:$true] %s17
      %23 = dma.hbm_to_vmem [thread:$0]  %s16, 256, %s18, [#allocation3], 128, 128, 8
    $region5: #{tpu_custom_call.1} parent=1 // pred_fallthru
      _
    // Predicated region
    $region6: #{tpu_custom_call.1} parent=1 // pred_check
      _
    $region7: #{tpu_custom_call.1} parent=1 // pred_check_branch
      %25 = sbr.rel (0) target = $region9
    $region8: #{tpu_custom_call.1} parent=1 // pred_region
      %27 = vsyncadd [#allocation6], 0
      %s29 = sshll.u32 %s1, 4
      %s30 = int_to_ptr.hbm [resolvable:$true] %s29
      %s31 = sshll.u32 [#allocation5], 4
      %s32 = int_to_ptr.vmem [resolvable:$true] %s31
      %34 = dma.hbm_to_vmem [thread:$0]  %s30, 16, %s32, [#allocation6]
    $region9: #{tpu_custom_call.1} parent=1 // pred_fallthru
      _
    // Predicated region
    $region10: #{tpu_custom_call.1} parent=1 // pred_check
      _
    $region11: #{tpu_custom_call.1} parent=1 // pred_check_branch
      %36 = sbr.rel (0) target = $region13
    $region12: #{tpu_custom_call.1} parent=1 // pred_region
      _
    $region13: #{tpu_custom_call.1} parent=1 // pred_fallthru
      _
    // Predicated region
    $region14: #{tpu_custom_call.1} parent=1 // pred_check
      _
    $region15: #{tpu_custom_call.1} parent=1 // pred_check_branch
      %38 = sbr.rel (0) target = $region17
    $region16: #{tpu_custom_call.1} parent=1 // pred_region
      %40 = dma.done [#allocation3], 256
    $region17: #{tpu_custom_call.1} parent=1 // pred_fallthru
      _
    // Predicated region
    $region18: #{tpu_custom_call.1} parent=1 // pred_check
      _
    $region19: #{tpu_custom_call.1} parent=1 // pred_check_branch
      %42 = sbr.rel (0) target = $region21
    $region20: #{tpu_custom_call.1} parent=1 // pred_region
      %44 = dma.done [#allocation6], 16
    $region21: #{tpu_custom_call.1} parent=1 // pred_fallthru
      _
    %v45 = vld [vmem:[#allocation2] sm:$0xff]
    %v46 = vld [vmem:[#allocation2 + $0x8] sm:$0xff]
    %v47 = vld [vmem:[#allocation5] sm:$0x1]
    %v48 = vld [vmem:[%s2] sm:$0x1]
    %vm49 = vcmask 261120
    %v50 = vsel %vm49, %v45, 0.0
    %51 = vadd.xlane.f32.xlu0 %v50
    %v52 = vpop.xlane.xlu0 %51
    %v53 = vsel %vm49, %v46, 0.0
    %54 = vadd.xlane.f32.xlu0 %v53
    %v55 = vpop.xlane.xlu0 %54
    %v56 = vrcp.pop 32.0
    %v57 = vmul.f32 32.0, %v56
    %v58 = vsub.f32 1.0, %v57
    %v59 = vmul.f32 %v56, %v58
    %v60 = vadd.f32 %v56, %v59
    %vm61 = vweird.f32 %v56
    %v62 = vsel %vm61, %v56, %v60
    %v63 = vmul.f32 %v52, %v62
    %v64 = vmul.f32 %v55, %v62
    %v65 = vsub.f32 %v45, %v63
    %v66 = vsub.f32 %v46, %v64
    %v67 = vmul.f32 %v65, %v65
    %v68 = vmul.f32 %v66, %v66
    %v69 = vsel %vm49, %v67, 0.0
    %70 = vadd.xlane.f32.xlu0 %v69
    %v71 = vpop.xlane.xlu0 %70
    %v72 = vsel %vm49, %v68, 0.0
    %73 = vadd.xlane.f32.xlu0 %v72
    %v74 = vpop.xlane.xlu0 %73
    %v75 = vmul.f32 %v71, %v62
    %v76 = vmul.f32 %v74, %v62
    %v77 = vrsqrt.pop %v75
    %v78 = vmul.f32 %v77, %v75
    %v79 = vmul.f32 %v78, %v77
    %v80 = vmul.f32 0.5, %v79
    %v81 = vsub.f32 1.5, %v80
    %v82 = vmul.f32 %v77, %v81
    %v83 = vmul.f32 %v75, %v82
    %vm84 = vcmp.eq.f32.partialorder %v75, inf
    %v85 = vsel %vm84, %v75, %v83
    %vm86 = vcmp.eq.f32.partialorder %v75, 0.0
    %v87 = vand.u32 %v75, 2147483648
    %v88 = vsel %vm86, %v87, %v85
    %v89 = vrsqrt.pop %v76
    %v90 = vmul.f32 %v89, %v76
    %v91 = vmul.f32 %v90, %v89
    %v92 = vmul.f32 0.5, %v91
    %v93 = vsub.f32 1.5, %v92
    %v94 = vmul.f32 %v89, %v93
    %v95 = vmul.f32 %v76, %v94
    %vm96 = vcmp.eq.f32.partialorder %v76, inf
    %v97 = vsel %vm96, %v76, %v95
    %vm98 = vcmp.eq.f32.partialorder %v76, 0.0
    %v99 = vand.u32 %v76, 2147483648
    %v100 = vsel %vm98, %v99, %v97
    %v101 = vadd.f32 %v88, 1e-06
    %v102 = vadd.f32 %v100, 1e-06
    %v103 = vrcp.pop %v101
    %v104 = vmul.f32 %v101, %v103
    %v105 = vsub.f32 1.0, %v104
    %v106 = vmul.f32 %v103, %v105
    %v107 = vadd.f32 %v103, %v106
    %vm108 = vweird.f32 %v101
    %vm109 = vweird.f32 %v103
    %vm110 = vmor %vm108, %vm109
    %v111 = vsel %vm110, %v103, %v107
    %v112 = vand.u32 2147483647, %v101
    %vm113 = vcmp.eq.f32.partialorder %v112, 8.507059e+37
    %v114 = vand.u32 %v101, 2147483648
    %v115 = vor.u32 1.1754944e-38, %v114
    %v116 = vsel %vm113, %v115, %v111
    %v117 = vrcp.pop %v102
    %v118 = vmul.f32 %v102, %v117
    %v119 = vsub.f32 1.0, %v118
    %v120 = vmul.f32 %v117, %v119
    %v121 = vadd.f32 %v117, %v120
    %vm122 = vweird.f32 %v102
    %vm123 = vweird.f32 %v117
    %vm124 = vmor %vm122, %vm123
    %v125 = vsel %vm124, %v117, %v121
    %v126 = vand.u32 2147483647, %v102
    %vm127 = vcmp.eq.f32.partialorder %v126, 8.507059e+37
    %v128 = vand.u32 %v102, 2147483648
    %v129 = vor.u32 1.1754944e-38, %v128
    %v130 = vsel %vm127, %v129, %v125
    %v132 = vperm.slane %v47, 0
    %v134 = vmul.f32 %v132, %v116
    %v135 = vmul.f32 %v132, %v130
    %v136 = vmul.f32 %v65, %v134
    %v137 = vmul.f32 %v66, %v135
    %v139 = vperm.slane %v48, 0
    %v141 = vadd.f32 %v136, %v139
    %v142 = vadd.f32 %v137, %v139
    %143 = vst.msk [vmem:[#allocation7] sm:$0xff] %vm49, %v141
    %144 = vst.msk [vmem:[#allocation7 + $0x8] sm:$0xff] %vm49, %v142
    // Predicated region
    $region22: #{tpu_custom_call.1} parent=1 // pred_check
      _
    $region23: #{tpu_custom_call.1} parent=1 // pred_check_branch
      %146 = sbr.rel (0) target = $region25
    $region24: #{tpu_custom_call.1} parent=1 // pred_region
      %148 = vsyncadd [#allocation4], 0
      %s149 = sshll.u32 [#allocation7], 4
      %s150 = int_to_ptr.vmem [resolvable:$true] %s149
      %s151 = sshll.u32 %s3, 4
      %s152 = int_to_ptr.hbm [resolvable:$true] %s151
      %157 = dma.vmem_to_hbm [thread:$0]  %s150, 256, %s152, [#allocation4], 128, 128, 8
    $region25: #{tpu_custom_call.1} parent=1 // pred_fallthru
      _
    // Predicated region
    $region26: #{tpu_custom_call.1} parent=1 // pred_check
      _
    $region27: #{tpu_custom_call.1} parent=1 // pred_check_branch
      %159 = sbr.rel (0) target = $region29
    $region28: #{tpu_custom_call.1} parent=1 // pred_region
      %161 = dma.done [#allocation4], 256
    $region29: #{tpu_custom_call.1} parent=1 // pred_fallthru
      _
    %162 = vsyncpa [#allocation3], 1
    %163 = vsyncpa [#allocation6], 1
    %164 = vsyncpa [#allocation4], 1

</llo_original>
